<compile_context>
chip_gen: v5e
topology: v5e:2x2
jax: 0.10.0
libtpu: 0.0.40
codegen_flags: <defaults>
</compile_context>

<pallas_src>
import functools

import jax
import jax.numpy as jnp
import numpy as np
from jax.experimental import pallas as pl
from jax.experimental.pallas import tpu as pltpu

# ----- problem sizes (consistent with the module's __init__) -----
BATCH = 2
INPUT_DIM = 16
NUM_NODES = 4
FEATURE_DIM = 32
OUTPUT_DIM = 8
NUM_ITERATIONS = 3

NF = NUM_NODES * FEATURE_DIM          # 128 -> packed lane-dense state slab
OUT_PAD = 128                         # lane-dense (unmasked) output stores


def _round_up(n, m):
    return ((n + m - 1) // m) * m


def adnn_kernel(x_ref, wx_ref, bias_ref, mix_ref, wout_ref, bout_ref, out_ref):
    """ADNN forward on one row-block, node axis packed onto the 128-lane axis.

    x_ref    : (br, Din)      bf16  input rows for this grid step
    wx_ref   : (Din, NF)      bf16  concat_i W_i[F:, :]     (fused x projection)
    bias_ref : (1, NF)        f32   concat_i b_i
    mix_ref  : (NF, NF)       bf16  conn[i,j] * W_i  fused mixing matrix
    wout_ref : (NF, OUT_PAD)  bf16  tile_N(W_out)/N, zero-padded to 128 lanes
    bout_ref : (1, OUT_PAD)   f32   output bias, zero-padded
    out_ref  : (br, OUT_PAD)  f32
    """
    # Iteration-invariant part: x projection + bias (hoisted out of the loop).
    base = (jnp.dot(x_ref[...], wx_ref[...], preferred_element_type=jnp.float32)
            + bias_ref[...])                                    # (br, NF) f32

    # Iteration 1: states start at zero, so the weighted-state term vanishes.
    s = jnp.maximum(base, 0.0)

    # Iterations 2..NUM_ITERATIONS: one (br,128)@(128,128) bf16 MXU op each.
    for _ in range(NUM_ITERATIONS - 1):
        s = jnp.maximum(
            jnp.dot(s.astype(jnp.bfloat16), mix_ref[...],
                    preferred_element_type=jnp.float32) + base,
            0.0)

    # Mean over nodes + output Linear fused into one (br,128)@(128,128) matmul
    # (output padded to 128 lanes -> unmasked lane-dense store).
    out_ref[...] = (
        jnp.dot(s.astype(jnp.bfloat16), wout_ref[...],
                preferred_element_type=jnp.float32)
        + bout_ref[...])


def pack_adnn_params(attn, wn, bn, wo, bo, compute_dtype=jnp.bfloat16):
    """One-time weight packing (hoist out of the per-forward path).

    attn : (N, N)        pre-softmax attention
    wn   : (N, F+Din, F) per-node weights (rows [0:F]->state, rows [F:]->x)
    bn   : (N, F)        per-node biases
    wo   : (F, O)        output weight (input-major, i.e. final @ wo)
    bo   : (1, O)        output bias
    """
    N, F, Din, O = NUM_NODES, FEATURE_DIM, INPUT_DIM, OUTPUT_DIM
    conn = jax.nn.softmax(attn.astype(jnp.float32), axis=1)      # (N, N)
    w_state = wn[:, :F, :].astype(jnp.float32)                   # (N, F, F)
    w_x = wn[:, F:, :].astype(jnp.float32)                       # (N, Din, F)

    # mix[j*F+f, i*F+g] = conn[i, j] * W_i[f, g]
    mix = jnp.einsum('ij,ifg->jfig', conn, w_state).reshape(NF, NF)
    # wx[d, i*F+g] = W_i[F+d, g]
    wx = jnp.transpose(w_x, (1, 0, 2)).reshape(Din, NF)
    bias = bn.reshape(1, NF).astype(jnp.float32)
    # Mean over nodes folded into the output weight; pad O -> 128 lanes.
    wout = jnp.tile(wo.astype(jnp.float32), (N, 1)) * (1.0 / N)  # (NF, O)
    wout_pad = jnp.zeros((NF, OUT_PAD), jnp.float32).at[:, :O].set(wout)
    bout_pad = jnp.zeros((1, OUT_PAD), jnp.float32).at[:, :O].set(
        bo.astype(jnp.float32))

    return (wx.astype(compute_dtype),
            bias,
            mix.astype(compute_dtype),
            wout_pad.astype(compute_dtype),
            bout_pad)


@jax.jit
def adnn_forward(x, wx, bias, mix, wout, bout):
    """Batched ADNN forward: one pallas_call, grid over row blocks.

    x : (B, Din) f32; the packed weight args come from pack_adnn_params().
    Returns (B, OUTPUT_DIM) f32.
    """
    B, Din = x.shape
    # Row-block size: 256 when there is enough batch to pipeline, else the
    # (8-aligned) padded batch in a single block.
    if B >= 256:
        block_rows = 256
    else:
        block_rows = _round_up(max(B, 8), 8)
    padded = _round_up(B, block_rows)
    if padded != B:
        x = jnp.pad(x, ((0, padded - B), (0, 0)))
    x = x.astype(jnp.bfloat16)                    # halve the only streamed input
    grid = (padded // block_rows,)

    flops = 2 * padded * (Din * NF
                          + (NUM_ITERATIONS - 1) * NF * NF
                          + NF * OUT_PAD)
    bytes_accessed = (x.size * 2 + wx.size * 2 + mix.size * 2 + wout.size * 2
                      + bias.size * 4 + bout.size * 4 + padded * OUT_PAD * 4)

    out = pl.pallas_call(
        adnn_kernel,
        out_shape=jax.ShapeDtypeStruct((padded, OUT_PAD), jnp.float32),
        grid=grid,
        in_specs=[
            pl.BlockSpec((block_rows, Din), lambda i: (i, 0)),   # x rows stream
            pl.BlockSpec((Din, NF), lambda i: (0, 0)),           # weights stay
            pl.BlockSpec((1, NF), lambda i: (0, 0)),             #   resident
            pl.BlockSpec((NF, NF), lambda i: (0, 0)),
            pl.BlockSpec((NF, OUT_PAD), lambda i: (0, 0)),
            pl.BlockSpec((1, OUT_PAD), lambda i: (0, 0)),
        ],
        out_specs=pl.BlockSpec((block_rows, OUT_PAD), lambda i: (i, 0)),
        compiler_params=pltpu.CompilerParams(
            dimension_semantics=("parallel",)),    # shard batch across v7x TCs
        cost_estimate=pl.CostEstimate(
            flops=flops, transcendentals=0, bytes_accessed=bytes_accessed),
    )(x, wx, bias, mix, wout, bout)

    return out[:B, :OUTPUT_DIM]


def adnn_reference(x, attn, wn, bn, wo, bo, num_iterations=NUM_ITERATIONS):
    """Pure-JAX f32 reference mirroring the PyTorch forward exactly."""
    conn = jax.nn.softmax(attn, axis=1)
    N = attn.shape[0]
    states = jnp.zeros((N, x.shape[0], FEATURE_DIM), jnp.float32)
    for _ in range(num_iterations):
        weighted = jnp.einsum('ij,jbf->ibf', conn, states)
        node_input = jnp.concatenate(
            [weighted, jnp.broadcast_to(x[None], (N, x.shape[0], x.shape[1]))],
            axis=2)
        states = jax.nn.relu(jnp.einsum('nbd,ndf->nbf', node_input, wn)
                             + bn[:, None, :])
    final = jnp.mean(states, axis=0)
    return final @ wo + bo


if __name__ == "__main__":
    key = jax.random.PRNGKey(0)
    kx, ka, kw, kb, kwo, kbo, kx2 = jax.random.split(key, 7)

    # Deterministic synthetic parameters (shapes match the module's __init__).
    x = jax.random.normal(kx, (BATCH, INPUT_DIM), jnp.float32)
    attn = jax.random.normal(ka, (NUM_NODES, NUM_NODES), jnp.float32)
    wn = jax.random.normal(
        kw, (NUM_NODES, FEATURE_DIM + INPUT_DIM, FEATURE_DIM), jnp.float32) * 0.1
    bn = jax.random.normal(kb, (NUM_NODES, FEATURE_DIM), jnp.float32) * 0.1
    wo = jax.random.normal(kwo, (FEATURE_DIM, OUTPUT_DIM), jnp.float32) * 0.1
    bo = jax.random.normal(kbo, (1, OUTPUT_DIM), jnp.float32) * 0.1

    # Weight packing done once, outside the per-forward path.
    packed = pack_adnn_params(attn, wn, bn, wo, bo)
    packed = jax.block_until_ready(packed)

    # bf16 matmul operands (f32 accumulation) -> 2e-2 tolerance vs f32 ref.
    TOL = dict(rtol=2e-2, atol=2e-2)

    # Small-batch case (module default: B=2) — single grid step.
    out = jax.block_until_ready(adnn_forward(x, *packed))
    ref = adnn_reference(x, attn, wn, bn, wo, bo)
    np.testing.assert_allclose(np.asarray(out), np.asarray(ref), **TOL)

    # Batched case exercising the row-block grid (2 steps of 256 rows).
    xb = jax.random.normal(kx2, (512, INPUT_DIM), jnp.float32)
    outb = jax.block_until_ready(adnn_forward(xb, *packed))
    refb = adnn_reference(xb, attn, wn, bn, wo, bo)
    np.testing.assert_allclose(np.asarray(outb), np.asarray(refb), **TOL)

    print("KERNEL_OK")
</pallas_src>

<mosaic_0001>
module attributes {stable_mosaic.version = 11 : i64} {
  func.func @adnn_kernel(%arg0: i32, %arg1: memref<8x16xbf16, #tpu.memory_space<vmem>>, %arg2: memref<16x128xbf16, #tpu.memory_space<vmem>>, %arg3: memref<1x128xf32, #tpu.memory_space<vmem>>, %arg4: memref<128x128xbf16, #tpu.memory_space<vmem>>, %arg5: memref<128x128xbf16, #tpu.memory_space<vmem>>, %arg6: memref<1x128xf32, #tpu.memory_space<vmem>>, %arg7: memref<8x128xf32, #tpu.memory_space<vmem>>) attributes {dimension_semantics = [#tpu.dimension_semantics<parallel>], iteration_bounds = array<i64: 1>, scalar_prefetch = 0 : i64, scratch_operands = 0 : i64, tpu.core_type = #tpu.core_type<tc>, window_params = [{transform_indices = @transform_0, window_bounds = array<i64: 8, 16>}, {pipeline_mode = #tpu.pipeline_mode<synchronous>, transform_indices = @transform_1, window_bounds = array<i64: 16, 128>}, {pipeline_mode = #tpu.pipeline_mode<synchronous>, transform_indices = @transform_2, window_bounds = array<i64: 1, 128>}, {pipeline_mode = #tpu.pipeline_mode<synchronous>, transform_indices = @transform_3, window_bounds = array<i64: 128, 128>}, {pipeline_mode = #tpu.pipeline_mode<synchronous>, transform_indices = @transform_4, window_bounds = array<i64: 128, 128>}, {pipeline_mode = #tpu.pipeline_mode<synchronous>, transform_indices = @transform_5, window_bounds = array<i64: 1, 128>}, {transform_indices = @transform_6, window_bounds = array<i64: 8, 128>}]} {
    %c0 = arith.constant 0 : index
    %c0_0 = arith.constant 0 : index
    %0 = vector.load %arg1[%c0, %c0_0] : memref<8x16xbf16, #tpu.memory_space<vmem>>, vector<8x16xbf16>
    %c0_1 = arith.constant 0 : index
    %c0_2 = arith.constant 0 : index
    %1 = vector.load %arg2[%c0_1, %c0_2] : memref<16x128xbf16, #tpu.memory_space<vmem>>, vector<16x128xbf16>
    %cst = arith.constant dense<0.000000e+00> : vector<8x128xf32>
    %2 = tpu.matmul %0, %1, %cst {dimension_numbers = #tpu.dot_dimension_numbers<[1], [0], [0], [1], [0, 0, 1, 1], [], []>} : vector<8x16xbf16>, vector<16x128xbf16>, vector<8x128xf32> -> vector<8x128xf32>
    %c0_3 = arith.constant 0 : index
    %c0_4 = arith.constant 0 : index
    %3 = vector.load %arg3[%c0_3, %c0_4] : memref<1x128xf32, #tpu.memory_space<vmem>>, vector<1x128xf32>
    %4 = vector.broadcast %3 : vector<1x128xf32> to vector<8x128xf32>
    %5 = arith.addf %2, %4 : vector<8x128xf32>
    %cst_5 = arith.constant 0.000000e+00 : f32
    %6 = vector.broadcast %cst_5 : f32 to vector<8x128xf32>
    %7 = arith.maximumf %5, %6 : vector<8x128xf32>
    %8 = arith.truncf %7 : vector<8x128xf32> to vector<8x128xbf16>
    %c0_6 = arith.constant 0 : index
    %c0_7 = arith.constant 0 : index
    %9 = vector.load %arg4[%c0_6, %c0_7] : memref<128x128xbf16, #tpu.memory_space<vmem>>, vector<128x128xbf16>
    %cst_8 = arith.constant dense<0.000000e+00> : vector<8x128xf32>
    %10 = tpu.matmul %8, %9, %cst_8 {dimension_numbers = #tpu.dot_dimension_numbers<[1], [0], [0], [1], [0, 0, 1, 1], [], []>} : vector<8x128xbf16>, vector<128x128xbf16>, vector<8x128xf32> -> vector<8x128xf32>
    %11 = arith.addf %10, %5 : vector<8x128xf32>
    %cst_9 = arith.constant 0.000000e+00 : f32
    %12 = vector.broadcast %cst_9 : f32 to vector<8x128xf32>
    %13 = arith.maximumf %11, %12 : vector<8x128xf32>
    %14 = arith.truncf %13 : vector<8x128xf32> to vector<8x128xbf16>
    %c0_10 = arith.constant 0 : index
    %c0_11 = arith.constant 0 : index
    %15 = vector.load %arg4[%c0_10, %c0_11] : memref<128x128xbf16, #tpu.memory_space<vmem>>, vector<128x128xbf16>
    %cst_12 = arith.constant dense<0.000000e+00> : vector<8x128xf32>
    %16 = tpu.matmul %14, %15, %cst_12 {dimension_numbers = #tpu.dot_dimension_numbers<[1], [0], [0], [1], [0, 0, 1, 1], [], []>} : vector<8x128xbf16>, vector<128x128xbf16>, vector<8x128xf32> -> vector<8x128xf32>
    %17 = arith.addf %16, %5 : vector<8x128xf32>
    %cst_13 = arith.constant 0.000000e+00 : f32
    %18 = vector.broadcast %cst_13 : f32 to vector<8x128xf32>
    %19 = arith.maximumf %17, %18 : vector<8x128xf32>
    %20 = arith.truncf %19 : vector<8x128xf32> to vector<8x128xbf16>
    %c0_14 = arith.constant 0 : index
    %c0_15 = arith.constant 0 : index
    %21 = vector.load %arg5[%c0_14, %c0_15] : memref<128x128xbf16, #tpu.memory_space<vmem>>, vector<128x128xbf16>
    %cst_16 = arith.constant dense<0.000000e+00> : vector<8x128xf32>
    %22 = tpu.matmul %20, %21, %cst_16 {dimension_numbers = #tpu.dot_dimension_numbers<[1], [0], [0], [1], [0, 0, 1, 1], [], []>} : vector<8x128xbf16>, vector<128x128xbf16>, vector<8x128xf32> -> vector<8x128xf32>
    %c0_17 = arith.constant 0 : index
    %c0_18 = arith.constant 0 : index
    %23 = vector.load %arg6[%c0_17, %c0_18] : memref<1x128xf32, #tpu.memory_space<vmem>>, vector<1x128xf32>
    %24 = vector.broadcast %23 : vector<1x128xf32> to vector<8x128xf32>
    %25 = arith.addf %22, %24 : vector<8x128xf32>
    %c0_19 = arith.constant 0 : index
    %c0_20 = arith.constant 0 : index
    %26 = vector.load %arg7[%c0_19, %c0_20] : memref<8x128xf32, #tpu.memory_space<vmem>>, vector<8x128xf32>
    tpu.vector_store %arg7[%c0_19, %c0_20], %25 {strides = array<i32>} : memref<8x128xf32, #tpu.memory_space<vmem>>, vector<8x128xf32>,
    return
  }
  func.func @transform_0(%arg0: i32) -> (i32, i32) {
    %c0_i32 = arith.constant 0 : i32
    %c0_i32_0 = arith.constant 0 : i32
    return %arg0, %c0_i32 : i32, i32
  }
  func.func @transform_1(%arg0: i32) -> (i32, i32) {
    %c0_i32 = arith.constant 0 : i32
    %c0_i32_0 = arith.constant 0 : i32
    %c0_i32_1 = arith.constant 0 : i32
    return %c0_i32, %c0_i32_0 : i32, i32
  }
  func.func @transform_2(%arg0: i32) -> (i32, i32) {
    %c0_i32 = arith.constant 0 : i32
    %c0_i32_0 = arith.constant 0 : i32
    %c0_i32_1 = arith.constant 0 : i32
    return %c0_i32, %c0_i32_0 : i32, i32
  }
  func.func @transform_3(%arg0: i32) -> (i32, i32) {
    %c0_i32 = arith.constant 0 : i32
    %c0_i32_0 = arith.constant 0 : i32
    %c0_i32_1 = arith.constant 0 : i32
    return %c0_i32, %c0_i32_0 : i32, i32
  }
  func.func @transform_4(%arg0: i32) -> (i32, i32) {
    %c0_i32 = arith.constant 0 : i32
    %c0_i32_0 = arith.constant 0 : i32
    %c0_i32_1 = arith.constant 0 : i32
    return %c0_i32, %c0_i32_0 : i32, i32
  }
  func.func @transform_5(%arg0: i32) -> (i32, i32) {
    %c0_i32 = arith.constant 0 : i32
    %c0_i32_0 = arith.constant 0 : i32
    %c0_i32_1 = arith.constant 0 : i32
    return %c0_i32, %c0_i32_0 : i32, i32
  }
  func.func @transform_6(%arg0: i32) -> (i32, i32) {
    %c0_i32 = arith.constant 0 : i32
    %c0_i32_0 = arith.constant 0 : i32
    return %arg0, %c0_i32 : i32, i32
  }
}

</mosaic_0001>

<llo_original>
// kernel: adnn_forward.1
$region0: #{adnn_forward.1}
  #allocation0 [shape = 'u32[]', space=smem, size = 0x4, offset = 0x4, fixed_abs, tag = 'smem constant byte address 0x4 - core index']
  #allocation1 [shape = 'u32[72,128]{1,0:T(1,128)}', space=vmem, size = 0x9000, scoped, tag = 'internal scratch']
  %s0 = inlined_call_operand.vmem [shape: bf16[8,16], index: 0, kind: input, shape index: {}]
  %s1 = inlined_call_operand.vmem [shape: bf16[16,128], index: 1, kind: input, shape index: {}]
  %s2 = inlined_call_operand.vmem [shape: f32[1,128], index: 2, kind: input, shape index: {}]
  %s3 = inlined_call_operand.hbm [shape: bf16[128,128], index: 3, kind: input, shape index: {}]
  %s4 = inlined_call_operand.hbm [shape: bf16[128,128], index: 4, kind: input, shape index: {}]
  %s5 = inlined_call_operand.vmem [shape: f32[1,128], index: 5, kind: input, shape index: {}]
  %s6 = inlined_call_operand.vmem [shape: f32[8,128], index: 6, kind: output, shape index: {}]
  %s7 = sld [smem:[#allocation0]]
  $region42: #{adnn_forward.1} parent=0
    _
  %s9 = ssub.s32 1, %s7
  %s10 = scalar_select 0, %s9, %s7
  $region1: #{adnn_forward.1} parent=0
    #allocation2 [shape = 'u8[32768]{0}', space=vmem, size = 0x8000, scoped, tag = 'input window, operand 3, single buffered']
    #allocation3 [shape = 's32[1]{0}', space=sflag, size = 0x4, scoped, tag = 'scoped memory for adnn_forward.1']
    #allocation4 [shape = 'u8[32768]{0}', space=vmem, size = 0x8000, scoped, tag = 'input window, operand 4, single buffered']
    #allocation5 [shape = 's32[1]{0}', space=sflag, size = 0x4, scoped, tag = 'scoped memory for adnn_forward.1']
    %11 = vsyncpa [#allocation3], 0
    %12 = vsyncpa [#allocation5], 0
    // Predicated region
    $region2: #{adnn_forward.1} parent=1 // pred_check
      _
    $region3: #{adnn_forward.1} parent=1 // pred_check_branch
      %14 = sbr.rel (0) target = $region5
    $region4: #{adnn_forward.1} parent=1 // pred_region
      _
    $region5: #{adnn_forward.1} parent=1 // pred_fallthru
      _
    // Predicated region
    $region6: #{adnn_forward.1} parent=1 // pred_check
      _
    $region7: #{adnn_forward.1} parent=1 // pred_check_branch
      %16 = sbr.rel (0) target = $region9
    $region8: #{adnn_forward.1} parent=1 // pred_region
      _
    $region9: #{adnn_forward.1} parent=1 // pred_fallthru
      _
    // Predicated region
    $region10: #{adnn_forward.1} parent=1 // pred_check
      _
    $region11: #{adnn_forward.1} parent=1 // pred_check_branch
      %18 = sbr.rel (0) target = $region13
    $region12: #{adnn_forward.1} parent=1 // pred_region
      _
    $region13: #{adnn_forward.1} parent=1 // pred_fallthru
      _
    // Predicated region
    $region14: #{adnn_forward.1} parent=1 // pred_check
      _
    $region15: #{adnn_forward.1} parent=1 // pred_check_branch
      %20 = sbr.rel (0) target = $region17
    $region16: #{adnn_forward.1} parent=1 // pred_region
      %22 = vsyncadd [#allocation3], 0
      %s23 = sshll.u32 %s3, 4
      %s24 = int_to_ptr.hbm [resolvable:$true] %s23
      %s25 = sshll.u32 [#allocation2], 4
      %s26 = int_to_ptr.vmem [resolvable:$true] %s25
      %31 = dma.hbm_to_vmem [thread:$0]  %s24, 1024, %s26, [#allocation3], 64, 64, 4
    $region17: #{adnn_forward.1} parent=1 // pred_fallthru
      _
    // Predicated region
    $region18: #{adnn_forward.1} parent=1 // pred_check
      _
    $region19: #{adnn_forward.1} parent=1 // pred_check_branch
      %33 = sbr.rel (0) target = $region21
    $region20: #{adnn_forward.1} parent=1 // pred_region
      %35 = vsyncadd [#allocation5], 0
      %s36 = sshll.u32 %s4, 4
      %s37 = int_to_ptr.hbm [resolvable:$true] %s36
      %s38 = sshll.u32 [#allocation4], 4
      %s39 = int_to_ptr.vmem [resolvable:$true] %s38
      %44 = dma.hbm_to_vmem [thread:$0]  %s37, 1024, %s39, [#allocation5], 64, 64, 4
    $region21: #{adnn_forward.1} parent=1 // pred_fallthru
      _
    // Predicated region
    $region22: #{adnn_forward.1} parent=1 // pred_check
      _
    $region23: #{adnn_forward.1} parent=1 // pred_check_branch
      %46 = sbr.rel (0) target = $region25
    $region24: #{adnn_forward.1} parent=1 // pred_region
      _
    $region25: #{adnn_forward.1} parent=1 // pred_fallthru
      _
    // Predicated region
    $region26: #{adnn_forward.1} parent=1 // pred_check
      _
    $region27: #{adnn_forward.1} parent=1 // pred_check_branch
      %48 = sbr.rel (0) target = $region29
    $region28: #{adnn_forward.1} parent=1 // pred_region
      %50 = dma.done [#allocation3], 1024
    $region29: #{adnn_forward.1} parent=1 // pred_fallthru
      _
    // Predicated region
    $region30: #{adnn_forward.1} parent=1 // pred_check
      _
    $region31: #{adnn_forward.1} parent=1 // pred_check_branch
      %52 = sbr.rel (0) target = $region33
    $region32: #{adnn_forward.1} parent=1 // pred_region
      %54 = dma.done [#allocation5], 1024
    $region33: #{adnn_forward.1} parent=1 // pred_fallthru
      _
    %v56 = vld [vmem:[%s0] sm:$0xf]
    %v57 = vld [vmem:[%s1] sm:$0xf]
    %v58 = vld [vmem:[%s1 + $0x4] sm:$0xf]
    %v59 = vld [vmem:[%s2] sm:$0x1]
    %v61 = vperm.slane %v59, 0
    %v65 = vunpack.c.l.b16 %v57
    %v66 = vunpack.c.l.b16 %v58
    %v67 = vpack.c.b16 %v66, %v65
    %vm69 = vcmask 130048
    %v71 = vsel %vm69, %v56, 0
    %73 = vmatpush.bf16.msra.mxu0 0
    %74 = vmatpush.bf16.msra.mxu0 0
    %75 = vmatpush.bf16.msra.mxu0 0
    %76 = vmatpush.bf16.msra.mxu0 0
    %77 = vmatpush.bf16.msra.mxu0 0
    %78 = vmatpush.bf16.msra.mxu0 0
    %79 = vmatpush.bf16.msra.mxu0 0
    %80 = vmatpush.bf16.msra.mxu0 %v67
    %81 = vmatmul.bf16.gmra.mxu0 %v71
    %v82 = vpop.f32.mrf.mxu0
    %v83 = vadd.f32 %v61, %v82
    %v84 = vpop.f32.mrf.mxu0
    %85 = vdwg.mxu0
    %v86 = vmax.f32 %v83, 0.0
    %v87 = vpack.c.bf16 %v86, %v86
    %v88 = vld [vmem:[#allocation2] sm:$0xf]
    %v89 = vld [vmem:[#allocation2 + $0x4] sm:$0xf]
    %v90 = vld [vmem:[#allocation2 + $0x8] sm:$0xf]
    %v91 = vld [vmem:[#allocation2 + $0xc] sm:$0xf]
    %v92 = vld [vmem:[#allocation2 + $0x10] sm:$0xf]
    %v93 = vld [vmem:[#allocation2 + $0x14] sm:$0xf]
    %v94 = vld [vmem:[#allocation2 + $0x18] sm:$0xf]
    %v95 = vld [vmem:[#allocation2 + $0x1c] sm:$0xf]
    %v96 = vld [vmem:[#allocation2 + $0x20] sm:$0xf]
    %v97 = vld [vmem:[#allocation2 + $0x24] sm:$0xf]
    %v98 = vld [vmem:[#allocation2 + $0x28] sm:$0xf]
    %v99 = vld [vmem:[#allocation2 + $0x2c] sm:$0xf]
    %v100 = vld [vmem:[#allocation2 + $0x30] sm:$0xf]
    %v101 = vld [vmem:[#allocation2 + $0x34] sm:$0xf]
    %v102 = vld [vmem:[#allocation2 + $0x38] sm:$0xf]
    %v103 = vld [vmem:[#allocation2 + $0x3c] sm:$0xf]
    %v120 = vunpack.c.l.b16 %v88
    %v121 = vunpack.c.l.b16 %v89
    %v122 = vunpack.c.l.b16 %v90
    %v123 = vunpack.c.l.b16 %v91
    %v124 = vunpack.c.l.b16 %v92
    %v125 = vunpack.c.l.b16 %v93
    %v126 = vunpack.c.l.b16 %v94
    %v127 = vunpack.c.l.b16 %v95
    %v128 = vunpack.c.l.b16 %v96
    %v129 = vunpack.c.l.b16 %v97
    %v130 = vunpack.c.l.b16 %v98
    %v131 = vunpack.c.l.b16 %v99
    %v132 = vunpack.c.l.b16 %v100
    %v133 = vunpack.c.l.b16 %v101
    %v134 = vunpack.c.l.b16 %v102
    %v135 = vunpack.c.l.b16 %v103
    %v136 = vpack.c.b16 %v121, %v120
    %v137 = vpack.c.b16 %v123, %v122
    %v138 = vpack.c.b16 %v125, %v124
    %v139 = vpack.c.b16 %v127, %v126
    %v140 = vpack.c.b16 %v129, %v128
    %v141 = vpack.c.b16 %v131, %v130
    %v142 = vpack.c.b16 %v133, %v132
    %v143 = vpack.c.b16 %v135, %v134
    %152 = vmatpush.bf16.msra.mxu0 %v143
    %153 = vmatpush.bf16.msra.mxu0 %v142
    %154 = vmatpush.bf16.msra.mxu0 %v141
    %155 = vmatpush.bf16.msra.mxu0 %v140
    %156 = vmatpush.bf16.msra.mxu0 %v139
    %157 = vmatpush.bf16.msra.mxu0 %v138
    %158 = vmatpush.bf16.msra.mxu0 %v137
    %159 = vmatpush.bf16.msra.mxu0 %v136
    %160 = vmatmul.bf16.gmra.mxu0 %v87
    %v161 = vpop.f32.mrf.mxu0
    %v162 = vadd.f32 %v83, %v161
    %v163 = vpop.f32.mrf.mxu0
    %164 = vdwg.mxu0
    %v165 = vmax.f32 %v162, 0.0
    %v166 = vpack.c.bf16 %v165, %v165
    %167 = vmatpush.bf16.msra.mxu0 %v143
    %168 = vmatpush.bf16.msra.mxu0 %v142
    %169 = vmatpush.bf16.msra.mxu0 %v141
    %170 = vmatpush.bf16.msra.mxu0 %v140
    %171 = vmatpush.bf16.msra.mxu0 %v139
    %172 = vmatpush.bf16.msra.mxu0 %v138
    %173 = vmatpush.bf16.msra.mxu0 %v137
    %174 = vmatpush.bf16.msra.mxu0 %v136
    %175 = vmatmul.bf16.gmra.mxu0 %v166
    %v176 = vpop.f32.mrf.mxu0
    %v177 = vadd.f32 %v83, %v176
    %v178 = vpop.f32.mrf.mxu0
    %179 = vdwg.mxu0
    %v180 = vmax.f32 %v177, 0.0
    %v181 = vpack.c.bf16 %v180, %v180
    %v182 = vld [vmem:[#allocation4] sm:$0xf]
    %v183 = vld [vmem:[#allocation4 + $0x4] sm:$0xf]
    %v184 = vld [vmem:[#allocation4 + $0x8] sm:$0xf]
    %v185 = vld [vmem:[#allocation4 + $0xc] sm:$0xf]
    %v186 = vld [vmem:[#allocation4 + $0x10] sm:$0xf]
    %v187 = vld [vmem:[#allocation4 + $0x14] sm:$0xf]
    %v188 = vld [vmem:[#allocation4 + $0x18] sm:$0xf]
    %v189 = vld [vmem:[#allocation4 + $0x1c] sm:$0xf]
    %v190 = vld [vmem:[#allocation4 + $0x20] sm:$0xf]
    %v191 = vld [vmem:[#allocation4 + $0x24] sm:$0xf]
    %v192 = vld [vmem:[#allocation4 + $0x28] sm:$0xf]
    %v193 = vld [vmem:[#allocation4 + $0x2c] sm:$0xf]
    %v194 = vld [vmem:[#allocation4 + $0x30] sm:$0xf]
    %v195 = vld [vmem:[#allocation4 + $0x34] sm:$0xf]
    %v196 = vld [vmem:[#allocation4 + $0x38] sm:$0xf]
    %v197 = vld [vmem:[#allocation4 + $0x3c] sm:$0xf]
    %v198 = vld [vmem:[%s5] sm:$0x1]
    %v200 = vperm.slane %v198, 0
    %v218 = vunpack.c.l.b16 %v182
    %v219 = vunpack.c.l.b16 %v183
    %v220 = vunpack.c.l.b16 %v184
    %v221 = vunpack.c.l.b16 %v185
    %v222 = vunpack.c.l.b16 %v186
    %v223 = vunpack.c.l.b16 %v187
    %v224 = vunpack.c.l.b16 %v188
    %v225 = vunpack.c.l.b16 %v189
    %v226 = vunpack.c.l.b16 %v190
    %v227 = vunpack.c.l.b16 %v191
    %v228 = vunpack.c.l.b16 %v192
    %v229 = vunpack.c.l.b16 %v193
    %v230 = vunpack.c.l.b16 %v194
    %v231 = vunpack.c.l.b16 %v195
    %v232 = vunpack.c.l.b16 %v196
    %v233 = vunpack.c.l.b16 %v197
    %v234 = vpack.c.b16 %v219, %v218
    %v235 = vpack.c.b16 %v221, %v220
    %v236 = vpack.c.b16 %v223, %v222
    %v237 = vpack.c.b16 %v225, %v224
    %v238 = vpack.c.b16 %v227, %v226
    %v239 = vpack.c.b16 %v229, %v228
    %v240 = vpack.c.b16 %v231, %v230
    %v241 = vpack.c.b16 %v233, %v232
    %250 = vmatpush.bf16.msra.mxu0 %v241
    %251 = vmatpush.bf16.msra.mxu0 %v240
    %252 = vmatpush.bf16.msra.mxu0 %v239
    %253 = vmatpush.bf16.msra.mxu0 %v238
    %254 = vmatpush.bf16.msra.mxu0 %v237
    %255 = vmatpush.bf16.msra.mxu0 %v236
    %256 = vmatpush.bf16.msra.mxu0 %v235
    %257 = vmatpush.bf16.msra.mxu0 %v234
    %258 = vmatmul.bf16.gmra.mxu0 %v181
    %v259 = vpop.f32.mrf.mxu0
    %v260 = vadd.f32 %v200, %v259
    %v261 = vpop.f32.mrf.mxu0
    %262 = vdwg.mxu0
    %263 = vst [vmem:[%s6] sm:$0xff] %v260
    // Predicated region
    $region34: #{adnn_forward.1} parent=1 // pred_check
      _
    $region35: #{adnn_forward.1} parent=1 // pred_check_branch
      %265 = sbr.rel (0) target = $region37
    $region36: #{adnn_forward.1} parent=1 // pred_region
      _
    $region37: #{adnn_forward.1} parent=1 // pred_fallthru
      _
    // Predicated region
    $region38: #{adnn_forward.1} parent=1 // pred_check
      _
    $region39: #{adnn_forward.1} parent=1 // pred_check_branch
      %267 = sbr.rel (0) target = $region41
    $region40: #{adnn_forward.1} parent=1 // pred_region
      _
    $region41: #{adnn_forward.1} parent=1 // pred_fallthru
      _
    %268 = vsyncpa [#allocation3], 1
    %269 = vsyncpa [#allocation5], 1

</llo_original>
